<compile_context>
chip_gen: v5e
topology: v5e:2x2
jax: 0.10.0
libtpu: 0.0.40
codegen_flags: <defaults>
</compile_context>

<pallas_src>
import math

import numpy as np
import jax
import jax.numpy as jnp
from jax import lax
from jax.experimental import pallas as pl
from jax.experimental.pallas import tpu as pltpu


# ----------------------------------------------------------------------------
# Host-side constant construction (mirrors the PyTorch module's __init__).
# ----------------------------------------------------------------------------
def get_freq_indices(method):
    num_freq = int(method[3:])
    if 'top' in method:
        all_x = [0, 0, 6, 0, 0, 1, 1, 4, 5, 1, 3, 0, 0, 0, 3, 2,
                 4, 6, 3, 5, 5, 2, 6, 5, 5, 3, 3, 4, 2, 2, 6, 1]
        all_y = [0, 1, 0, 5, 2, 0, 2, 0, 0, 6, 0, 4, 6, 3, 5, 2,
                 6, 3, 3, 3, 5, 1, 1, 2, 4, 2, 1, 1, 3, 0, 5, 3]
    elif 'low' in method:
        all_x = [0, 0, 1, 1, 0, 2, 2, 1, 2, 0, 3, 4, 0, 1, 3, 0,
                 1, 2, 3, 4, 5, 0, 1, 2, 3, 4, 5, 6, 1, 2, 3, 4]
        all_y = [0, 1, 0, 1, 2, 0, 1, 2, 2, 3, 0, 0, 4, 3, 1, 5,
                 4, 3, 2, 1, 0, 6, 5, 4, 3, 2, 1, 0, 6, 5, 4, 3]
    else:  # 'bot'
        all_x = [6, 1, 3, 3, 2, 4, 1, 2, 4, 4, 5, 1, 4, 6, 2, 5,
                 6, 1, 6, 2, 2, 4, 3, 3, 5, 5, 6, 2, 5, 5, 3, 6]
        all_y = [6, 4, 4, 6, 6, 3, 1, 4, 4, 5, 6, 5, 2, 2, 5, 1,
                 4, 3, 5, 0, 3, 1, 1, 2, 4, 2, 1, 1, 5, 3, 3, 3]
    return all_x[:num_freq], all_y[:num_freq]


def _build_filter(pos, freq, POS):
    result = math.cos(math.pi * freq * (pos + 0.5) / POS) / math.sqrt(POS)
    return result * math.sqrt(2) if freq != 0 else result


def get_dct_filter(tile_x, tile_y, mapper_x, mapper_y, channel):
    dct = np.zeros((channel, tile_x, tile_y), dtype=np.float32)
    c_part = channel // len(mapper_x)
    for i, (ux, vy) in enumerate(zip(mapper_x, mapper_y)):
        for tx in range(tile_x):
            for ty in range(tile_y):
                dct[i * c_part:(i + 1) * c_part, tx, ty] = (
                    _build_filter(tx, ux, tile_x) * _build_filter(ty, vy, tile_y))
    return dct


def conv7x7_as_matrices(k2, h, w):
    """Fold the fixed 7x7, 2->1 channel, pad-3, bias-free conv into two dense
    (P, P) operators so that  s_flat = Ca @ avg_flat + Cm @ max_flat."""
    P = h * w
    ca = np.zeros((P, P), dtype=np.float32)
    cm = np.zeros((P, P), dtype=np.float32)
    for oh in range(h):
        for ow in range(w):
            p = oh * w + ow
            for i in range(7):
                ih = oh + i - 3
                if ih < 0 or ih >= h:
                    continue
                for j in range(7):
                    iw = ow + j - 3
                    if iw < 0 or iw >= w:
                        continue
                    q = ih * w + iw
                    ca[p, q] = k2[0, i, j]
                    cm[p, q] = k2[1, i, j]
    return ca, cm


# ----------------------------------------------------------------------------
# Pallas kernel: one batch sample per grid step, fully fused.
# ----------------------------------------------------------------------------
def msa_kernel(x_ref, ka_ref, km_ref, wdct_ref, w1_ref, w2_ref, o_ref):
    # x_ref: (1, C, P) — channels on sublanes, flattened H*W on lanes.
    xf = x_ref[0].astype(jnp.float32)                          # (C, P)

    # --- MultiSpectralDCTLayer: spatial attention map ------------------------
    avg = jnp.mean(xf, axis=0, keepdims=True)                  # (1, P)
    mx = jnp.max(xf, axis=0, keepdims=True)                    # (1, P)
    # 7x7 conv folded into dense operators: s = avg @ Ca.T + max @ Cm.T
    s = (jnp.dot(avg, ka_ref[...], preferred_element_type=jnp.float32) +
         jnp.dot(mx, km_ref[...], preferred_element_type=jnp.float32))  # (1, P)
    sig = 1.0 / (1.0 + jnp.exp(-s))                            # sigmoid, (1, P)

    # --- DCT-weighted spatial sum: y[c] = sum_p dct[c, p] * sig[p] -----------
    # trans_b dot_general puts the result on the channel/sublane axis so the
    # final per-channel rescale is a plain lane-broadcast (no transpose).
    sig8 = jnp.broadcast_to(sig, (8, sig.shape[1]))            # pad to 8 sublanes
    y = lax.dot_general(wdct_ref[...], sig8,
                        (((1,), (1,)), ((), ())),
                        preferred_element_type=jnp.float32)    # (C, 8)

    # --- channel MLP: sigmoid(W2 @ relu(W1 @ y)) ------------------------------
    h = jnp.maximum(
        jnp.dot(w1_ref[...], y, preferred_element_type=jnp.float32), 0.0)  # (C//r, 8)
    z = 1.0 / (1.0 + jnp.exp(
        -jnp.dot(w2_ref[...], h, preferred_element_type=jnp.float32)))     # (C, 8)

    # --- rescale: out[c, p] = x[c, p] * z[c] ----------------------------------
    o_ref[0] = (xf * z[:, 0:1]).astype(o_ref.dtype)


def multispectral_attention_forward(x, ka_t, km_t, wdct, w1, w2):
    """x: (N, C, H, W) NCHW; ka_t/km_t: (P, P); wdct: (C, P); w1: (C//r, C);
    w2: (C, C//r).  Returns (N, C, H, W)."""
    N, C, H, W = x.shape
    P = H * W
    Cr = w1.shape[0]
    x3 = x.reshape(N, C, P)       # contiguous reshape only — no transpose

    out3 = pl.pallas_call(
        msa_kernel,
        out_shape=jax.ShapeDtypeStruct((N, C, P), x.dtype),
        grid_spec=pltpu.PrefetchScalarGridSpec(
            num_scalar_prefetch=0,
            grid=(N,),
            in_specs=[
                pl.BlockSpec((1, C, P), lambda n: (n, 0, 0)),   # x sample
                pl.BlockSpec((P, P), lambda n: (0, 0)),         # conv op (avg path)
                pl.BlockSpec((P, P), lambda n: (0, 0)),         # conv op (max path)
                pl.BlockSpec((C, P), lambda n: (0, 0)),         # DCT filter bank
                pl.BlockSpec((Cr, C), lambda n: (0, 0)),        # fc W1
                pl.BlockSpec((C, Cr), lambda n: (0, 0)),        # fc W2
            ],
            out_specs=pl.BlockSpec((1, C, P), lambda n: (n, 0, 0)),
        ),
        compiler_params=pltpu.CompilerParams(
            dimension_semantics=("parallel",)),
    )(x3, ka_t, km_t, wdct, w1, w2)
    return out3.reshape(N, C, H, W)


# ----------------------------------------------------------------------------
# Pure-JAX reference (independent conv path) for correctness checking.
# ----------------------------------------------------------------------------
def _reference_forward(x, conv_k, dct_filter, w1, w2):
    hp = lax.Precision.HIGHEST
    avg = jnp.mean(x, axis=1, keepdims=True)
    mx = jnp.max(x, axis=1, keepdims=True)
    am = jnp.concatenate([avg, mx], axis=1)                    # (N, 2, H, W)
    s = lax.conv_general_dilated(am, conv_k[None], (1, 1), ((3, 3), (3, 3)),
                                 dimension_numbers=('NCHW', 'OIHW', 'NCHW'),
                                 precision=hp)                 # (N, 1, H, W)
    sig = jax.nn.sigmoid(s)
    y = jnp.sum(sig * dct_filter[None], axis=(2, 3))           # (N, C)
    h = jnp.maximum(jnp.dot(y, w1.T, precision=hp), 0.0)
    z = jax.nn.sigmoid(jnp.dot(h, w2.T, precision=hp))
    return x * z[:, :, None, None]


if __name__ == "__main__":
    key = jax.random.PRNGKey(0)
    # Small but valid instantiation: channel=64, reduction=16, 'top16'
    # (channel % num_freq == 0 and channel // reduction >= 1); dct_h=dct_w=16
    # equal to the input spatial size, so x_pooled == x and H*W=256 is a
    # lane-dense multiple of 128.
    N, C, H, W = 2, 64, 16, 16
    reduction = 16
    freq_sel_method = "top16"
    dct_h, dct_w = H, W

    k_x, k_conv, k_w1, k_w2 = jax.random.split(key, 4)
    x = jax.random.normal(k_x, (N, C, H, W), dtype=jnp.float32)

    # 7x7, 2->1-channel conv of the DCT layer (bias-free), uniform init.
    bconv = 1.0 / math.sqrt(2 * 7 * 7)
    conv_k = jax.random.uniform(k_conv, (2, 7, 7), jnp.float32, -bconv, bconv)
    # fc: Linear(C, C//r) -> ReLU -> Linear(C//r, C) -> Sigmoid (bias-free).
    b1 = 1.0 / math.sqrt(C)
    w1 = jax.random.uniform(k_w1, (C // reduction, C), jnp.float32, -b1, b1)
    b2 = 1.0 / math.sqrt(C // reduction)
    w2 = jax.random.uniform(k_w2, (C, C // reduction), jnp.float32, -b2, b2)

    # Deterministic DCT filter bank (MultiSpectralDCTLayer.get_dct_filter).
    mx_idx, my_idx = get_freq_indices(freq_sel_method)
    mx_idx = [v * (dct_h // 7) for v in mx_idx]
    my_idx = [v * (dct_w // 7) for v in my_idx]
    dct_filter_np = get_dct_filter(dct_h, dct_w, mx_idx, my_idx, C)  # (C, H, W)

    # One-time host-side fold of the fixed 7x7 conv into dense (P, P) operators.
    ca, cm = conv7x7_as_matrices(np.asarray(conv_k), dct_h, dct_w)
    ka_t = jnp.asarray(ca.T)                 # so s_row = avg_row @ Ca.T
    km_t = jnp.asarray(cm.T)
    wdct = jnp.asarray(dct_filter_np.reshape(C, dct_h * dct_w))
    dct_filter = jnp.asarray(dct_filter_np)

    # TODO(synk): the AdaptiveAvgPool2d((dct_h, dct_w)) pre-pooling branch for
    # inputs whose spatial size differs from (dct_h, dct_w) is not implemented.

    out = multispectral_attention_forward(x, ka_t, km_t, wdct, w1, w2)
    out = jax.block_until_ready(out)

    ref = _reference_forward(x, conv_k, dct_filter, w1, w2)
    assert out.shape == (N, C, H, W)
    assert jnp.allclose(out, ref, atol=1e-3, rtol=1e-3), "mismatch vs reference"

    print("KERNEL_OK")
</pallas_src>

<mosaic_0001>
module attributes {stable_mosaic.version = 11 : i64} {
  func.func @msa_kernel(%arg0: i32, %arg1: memref<1x64x256xf32, #tpu.memory_space<vmem>>, %arg2: memref<256x256xf32, #tpu.memory_space<vmem>>, %arg3: memref<256x256xf32, #tpu.memory_space<vmem>>, %arg4: memref<64x256xf32, #tpu.memory_space<vmem>>, %arg5: memref<4x64xf32, #tpu.memory_space<vmem>>, %arg6: memref<64x4xf32, #tpu.memory_space<vmem>>, %arg7: memref<1x64x256xf32, #tpu.memory_space<vmem>>) attributes {dimension_semantics = [#tpu.dimension_semantics<parallel>], iteration_bounds = array<i64: 2>, scalar_prefetch = 0 : i64, scratch_operands = 0 : i64, tpu.core_type = #tpu.core_type<tc>, window_params = [{transform_indices = @transform_0, window_bounds = array<i64: 1, 64, 256>}, {pipeline_mode = #tpu.pipeline_mode<synchronous>, transform_indices = @transform_1, window_bounds = array<i64: 256, 256>}, {pipeline_mode = #tpu.pipeline_mode<synchronous>, transform_indices = @transform_2, window_bounds = array<i64: 256, 256>}, {pipeline_mode = #tpu.pipeline_mode<synchronous>, transform_indices = @transform_3, window_bounds = array<i64: 64, 256>}, {pipeline_mode = #tpu.pipeline_mode<synchronous>, transform_indices = @transform_4, window_bounds = array<i64: 4, 64>}, {pipeline_mode = #tpu.pipeline_mode<synchronous>, transform_indices = @transform_5, window_bounds = array<i64: 64, 4>}, {transform_indices = @transform_6, window_bounds = array<i64: 1, 64, 256>}]} {
    %c0 = arith.constant 0 : index
    %c0_0 = arith.constant 0 : index
    %c0_1 = arith.constant 0 : index
    %0 = vector.load %arg1[%c0, %c0_0, %c0_1] : memref<1x64x256xf32, #tpu.memory_space<vmem>>, vector<1x64x256xf32>
    %1 = vector.shape_cast %0 : vector<1x64x256xf32> to vector<64x256xf32>
    %cst = arith.constant dense<0.000000e+00> : vector<256xf32>
    %2 = vector.multi_reduction <add>, %1, %cst [0] : vector<64x256xf32> to vector<256xf32>
    %3 = vector.shape_cast %2 : vector<256xf32> to vector<1x256xf32>
    %cst_2 = arith.constant 6.400000e+01 : f32
    %4 = vector.broadcast %cst_2 : f32 to vector<1x256xf32>
    %5 = arith.divf %3, %4 : vector<1x256xf32>
    %cst_3 = arith.constant dense<0xFF800000> : vector<256xf32>
    %6 = vector.multi_reduction <maximumf>, %1, %cst_3 [0] : vector<64x256xf32> to vector<256xf32>
    %7 = vector.shape_cast %6 : vector<256xf32> to vector<1x256xf32>
    %c0_4 = arith.constant 0 : index
    %c0_5 = arith.constant 0 : index
    %8 = vector.load %arg2[%c0_4, %c0_5] : memref<256x256xf32, #tpu.memory_space<vmem>>, vector<256x256xf32>
    %cst_6 = arith.constant dense<0.000000e+00> : vector<1x256xf32>
    %9 = tpu.matmul %5, %8, %cst_6 {dimension_numbers = #tpu.dot_dimension_numbers<[1], [0], [0], [1], [0, 0, 1, 1], [], []>} : vector<1x256xf32>, vector<256x256xf32>, vector<1x256xf32> -> vector<1x256xf32>
    %c0_7 = arith.constant 0 : index
    %c0_8 = arith.constant 0 : index
    %10 = vector.load %arg3[%c0_7, %c0_8] : memref<256x256xf32, #tpu.memory_space<vmem>>, vector<256x256xf32>
    %cst_9 = arith.constant dense<0.000000e+00> : vector<1x256xf32>
    %11 = tpu.matmul %7, %10, %cst_9 {dimension_numbers = #tpu.dot_dimension_numbers<[1], [0], [0], [1], [0, 0, 1, 1], [], []>} : vector<1x256xf32>, vector<256x256xf32>, vector<1x256xf32> -> vector<1x256xf32>
    %12 = arith.addf %9, %11 : vector<1x256xf32>
    %cst_10 = arith.constant 0.000000e+00 : f32
    %13 = vector.broadcast %cst_10 : f32 to vector<1x256xf32>
    %14 = arith.subf %13, %12 : vector<1x256xf32>
    %15 = math.exp %14 : vector<1x256xf32>
    %cst_11 = arith.constant 1.000000e+00 : f32
    %16 = vector.broadcast %cst_11 : f32 to vector<1x256xf32>
    %17 = arith.addf %16, %15 : vector<1x256xf32>
    %cst_12 = arith.constant 1.000000e+00 : f32
    %18 = vector.broadcast %cst_12 : f32 to vector<1x256xf32>
    %19 = arith.divf %18, %17 : vector<1x256xf32>
    %20 = vector.shape_cast %19 : vector<1x256xf32> to vector<1x256xf32>
    %21 = vector.broadcast %20 : vector<1x256xf32> to vector<8x256xf32>
    %c0_13 = arith.constant 0 : index
    %c0_14 = arith.constant 0 : index
    %22 = vector.load %arg4[%c0_13, %c0_14] : memref<64x256xf32, #tpu.memory_space<vmem>>, vector<64x256xf32>
    %cst_15 = arith.constant dense<0.000000e+00> : vector<64x8xf32>
    %23 = tpu.matmul %22, %21, %cst_15 {dimension_numbers = #tpu.dot_dimension_numbers<[1], [1], [0], [0], [0, 0, 1, 0], [], []>} : vector<64x256xf32>, vector<8x256xf32>, vector<64x8xf32> -> vector<64x8xf32>
    %c0_16 = arith.constant 0 : index
    %c0_17 = arith.constant 0 : index
    %24 = vector.load %arg5[%c0_16, %c0_17] : memref<4x64xf32, #tpu.memory_space<vmem>>, vector<4x64xf32>
    %cst_18 = arith.constant dense<0.000000e+00> : vector<4x8xf32>
    %25 = tpu.matmul %24, %23, %cst_18 {dimension_numbers = #tpu.dot_dimension_numbers<[1], [0], [0], [1], [0, 0, 1, 1], [], []>} : vector<4x64xf32>, vector<64x8xf32>, vector<4x8xf32> -> vector<4x8xf32>
    %cst_19 = arith.constant 0.000000e+00 : f32
    %26 = vector.broadcast %cst_19 : f32 to vector<4x8xf32>
    %27 = arith.maximumf %25, %26 : vector<4x8xf32>
    %c0_20 = arith.constant 0 : index
    %c0_21 = arith.constant 0 : index
    %28 = vector.load %arg6[%c0_20, %c0_21] : memref<64x4xf32, #tpu.memory_space<vmem>>, vector<64x4xf32>
    %cst_22 = arith.constant dense<0.000000e+00> : vector<64x8xf32>
    %29 = tpu.matmul %28, %27, %cst_22 {dimension_numbers = #tpu.dot_dimension_numbers<[1], [0], [0], [1], [0, 0, 1, 1], [], []>} : vector<64x4xf32>, vector<4x8xf32>, vector<64x8xf32> -> vector<64x8xf32>
    %cst_23 = arith.constant 0.000000e+00 : f32
    %30 = vector.broadcast %cst_23 : f32 to vector<64x8xf32>
    %31 = arith.subf %30, %29 : vector<64x8xf32>
    %32 = math.exp %31 : vector<64x8xf32>
    %cst_24 = arith.constant 1.000000e+00 : f32
    %33 = vector.broadcast %cst_24 : f32 to vector<64x8xf32>
    %34 = arith.addf %33, %32 : vector<64x8xf32>
    %cst_25 = arith.constant 1.000000e+00 : f32
    %35 = vector.broadcast %cst_25 : f32 to vector<64x8xf32>
    %36 = arith.divf %35, %34 : vector<64x8xf32>
    %37 = vector.extract_strided_slice %36 {offsets = [0, 0], sizes = [64, 1], strides = [1, 1]} : vector<64x8xf32> to vector<64x1xf32>
    %38 = vector.broadcast %37 : vector<64x1xf32> to vector<64x256xf32>
    %39 = arith.mulf %1, %38 : vector<64x256xf32>
    %c0_26 = arith.constant 0 : index
    %c0_27 = arith.constant 0 : index
    %c0_28 = arith.constant 0 : index
    %40 = vector.load %arg7[%c0_26, %c0_27, %c0_28] : memref<1x64x256xf32, #tpu.memory_space<vmem>>, vector<1x64x256xf32>
    %41 = vector.shape_cast %40 : vector<1x64x256xf32> to vector<64x256xf32>
    %42 = vector.shape_cast %39 : vector<64x256xf32> to vector<1x64x256xf32>
    tpu.vector_store %arg7[%c0_26, %c0_27, %c0_28], %42 {strides = array<i32>} : memref<1x64x256xf32, #tpu.memory_space<vmem>>, vector<1x64x256xf32>,
    return
  }
  func.func @transform_0(%arg0: i32) -> (i32, i32, i32) {
    %c0_i32 = arith.constant 0 : i32
    %c0_i32_0 = arith.constant 0 : i32
    %c0_i32_1 = arith.constant 0 : i32
    return %arg0, %c0_i32, %c0_i32_0 : i32, i32, i32
  }
  func.func @transform_1(%arg0: i32) -> (i32, i32) {
    %c0_i32 = arith.constant 0 : i32
    %c0_i32_0 = arith.constant 0 : i32
    %c0_i32_1 = arith.constant 0 : i32
    return %c0_i32, %c0_i32_0 : i32, i32
  }
  func.func @transform_2(%arg0: i32) -> (i32, i32) {
    %c0_i32 = arith.constant 0 : i32
    %c0_i32_0 = arith.constant 0 : i32
    %c0_i32_1 = arith.constant 0 : i32
    return %c0_i32, %c0_i32_0 : i32, i32
  }
  func.func @transform_3(%arg0: i32) -> (i32, i32) {
    %c0_i32 = arith.constant 0 : i32
    %c0_i32_0 = arith.constant 0 : i32
    %c0_i32_1 = arith.constant 0 : i32
    return %c0_i32, %c0_i32_0 : i32, i32
  }
  func.func @transform_4(%arg0: i32) -> (i32, i32) {
    %c0_i32 = arith.constant 0 : i32
    %c0_i32_0 = arith.constant 0 : i32
    %c0_i32_1 = arith.constant 0 : i32
    return %c0_i32, %c0_i32_0 : i32, i32
  }
  func.func @transform_5(%arg0: i32) -> (i32, i32) {
    %c0_i32 = arith.constant 0 : i32
    %c0_i32_0 = arith.constant 0 : i32
    %c0_i32_1 = arith.constant 0 : i32
    return %c0_i32, %c0_i32_0 : i32, i32
  }
  func.func @transform_6(%arg0: i32) -> (i32, i32, i32) {
    %c0_i32 = arith.constant 0 : i32
    %c0_i32_0 = arith.constant 0 : i32
    %c0_i32_1 = arith.constant 0 : i32
    return %arg0, %c0_i32, %c0_i32_0 : i32, i32, i32
  }
}

</mosaic_0001>

<llo_original>
// kernel: tpu_custom_call.1
$region0: #{tpu_custom_call.1}
  #allocation0 [shape = 'u32[]', space=smem, size = 0x4, offset = 0x4, fixed_abs, tag = 'smem constant byte address 0x4 - core index']
  #allocation1 [shape = 'u32[72,128]{1,0:T(1,128)}', space=vmem, size = 0x9000, scoped, tag = 'internal scratch']
  %s0 = inlined_call_operand.hbm [shape: f32[2,64,256], index: 0, kind: input, shape index: {}]
  %s1 = inlined_call_operand.hbm [shape: f32[256,256], index: 1, kind: input, shape index: {}]
  %s2 = inlined_call_operand.hbm [shape: f32[256,256], index: 2, kind: input, shape index: {}]
  %s3 = inlined_call_operand.hbm [shape: f32[64,256], index: 3, kind: input, shape index: {}]
  %s4 = inlined_call_operand.vmem [shape: f32[4,64], index: 4, kind: input, shape index: {}]
  %s5 = inlined_call_operand.vmem [shape: f32[64,4], index: 5, kind: input, shape index: {}]
  %s6 = inlined_call_operand.hbm [shape: f32[2,64,256], index: 6, kind: output, shape index: {}]
  %s7 = sld [smem:[#allocation0]]
  $region73: #{tpu_custom_call.1} parent=0
    _
  %s9 = ssub.s32 1, %s7
  %s10 = scalar_select 0, %s9, %s7
  $region1: #{tpu_custom_call.1} parent=0
    #allocation2 [shape = 'u8[131072]{0}', space=vmem, size = 0x20000, scoped, tag = 'input window, operand 0']
    #allocation3 [shape = 's32[2]{0}', space=sflag, size = 0x8, scoped, tag = 'scoped memory for tpu_custom_call.1']
    #allocation4 [shape = 's32[2]{0}', space=sflag, size = 0x8, scoped, tag = 'scoped memory for tpu_custom_call.1']
    #allocation5 [shape = 'u8[262144]{0}', space=vmem, size = 0x40000, scoped, tag = 'input window, operand 1, single buffered']
    #allocation6 [shape = 's32[1]{0}', space=sflag, size = 0x4, scoped, tag = 'scoped memory for tpu_custom_call.1']
    #allocation7 [shape = 'u8[262144]{0}', space=vmem, size = 0x40000, scoped, tag = 'input window, operand 2, single buffered']
    #allocation8 [shape = 'u8[65536]{0}', space=vmem, size = 0x10000, scoped, tag = 'input window, operand 3, single buffered']
    #allocation9 [shape = 's32[1]{0}', space=sflag, size = 0x4, scoped, tag = 'scoped memory for tpu_custom_call.1']
    #allocation10 [shape = 'u8[131072]{0}', space=vmem, size = 0x20000, scoped, tag = 'output window, operand 0']
    %11 = vsyncpa [#allocation3], 0
    %s12 = scalar_lea.sflag [#allocation3], 1
    %13 = vsyncpa %s12, 0
    %14 = vsyncpa [#allocation6], 0
    %15 = vsyncpa [#allocation9], 0
    %16 = vsyncpa [#allocation4], 0
    %s17 = scalar_lea.sflag [#allocation4], 1
    %18 = vsyncpa %s17, 0
    loop: start=0, step=1, limit=4
    $region2: #{tpu_custom_call.1} parent=1 // loop_pre_header
      _
    $region3: #{tpu_custom_call.1} parent=1 // loop_header
      %s20 = sphi 0, %s24
      %p21 = scmp.ge.s32.totalorder %s20, 4
      %s30 = sphi 0, %s32
      %s33 = sphi 0, %s30
      %s34 = sphi 0, %s33
      %s50 = sphi 0, %s34
      %s54 = sphi 0, %s54
      %s56 = sphi 0, %s54
      %s57 = sphi 0, %s56
      %s71 = sphi 0, %s57
      %s75 = sphi 0, %s75
      %s77 = sphi 0, %s75
      %s78 = sphi 0, %s77
      %s92 = sphi 0, %s78
      %s96 = sphi 0, %s96
      %s98 = sphi 0, %s96
      %s99 = sphi 0, %s98
      %s113 = sphi 0, %s99
      %s117 = sphi 0, %s117
      %s119 = sphi 0, %s117
      %s120 = sphi 0, %s119
      %s134 = sphi 0, %s120
      %s138 = sphi 0, %s138
      %s140 = sphi 0, %s138
      %s141 = sphi 0, %s140
      %s155 = sphi 0, %s141
      %s161 = sphi 0, %s163
      %s164 = sphi 0, %s161
      %s165 = sphi 0, %s164
      %s181 = sphi 0, %s165
    $region4: #{tpu_custom_call.1} parent=1 // loop_header_branch
      %23 = sbr.rel (%p21) target = $region8
    $region5: #{tpu_custom_call.1} parent=1 // loop_body
      %s25 = ssub.s32 %s20, 1
      %s26 = ssub.s32 %s20, 2
      %s27 = sadd.s32 %s20, 1
      %s28 = ssub.s32 %s20, %s27
      %p29 = scmp.eq.s32.totalorder %s28, 0
      %s31 = sadd.s32 %s30, 1
      %s32 = scalar_select %p29, %s30, %s31
      %p35 = pneg %p29
      %p36 = scmp.eq.s32.totalorder %s20, 1
      %p37 = por %p35, %p36
      %p38 = scmp.ne.s32.totalorder %s30, %s33
      %p39 = scmp.eq.s32.totalorder %s20, 0
      %p40 = por %p38, %p39
      %p41 = scmp.ne.s32.totalorder %s30, %s33
      %p42 = scmp.eq.s32.totalorder %s25, 1
      %p43 = por %p41, %p42
      %p44 = scmp.ne.s32.totalorder %s33, %s34
      %p45 = scmp.eq.s32.totalorder %s25, 0
      %p46 = por %p44, %p45
      %p47 = scmp.ne.s32.totalorder %s33, %s34
      %p48 = scmp.eq.s32.totalorder %s26, 1
      %p49 = por %p47, %p48
      %p51 = scmp.ne.s32.totalorder %s34, %s50
      %p52 = scmp.eq.s32.totalorder %s26, 0
      %p53 = por %p51, %p52
      %s55 = sadd.s32 %s54, 1
      %p58 = scmp.eq.s32.totalorder %s20, 1
      %p59 = scmp.ne.s32.totalorder %s54, %s56
      %p60 = scmp.eq.s32.totalorder %s20, 0
      %p61 = por %p59, %p60
      %p62 = scmp.ne.s32.totalorder %s54, %s56
      %p63 = scmp.eq.s32.totalorder %s25, 1
      %p64 = por %p62, %p63
      %p65 = scmp.ne.s32.totalorder %s56, %s57
      %p66 = scmp.eq.s32.totalorder %s25, 0
      %p67 = por %p65, %p66
      %p68 = scmp.ne.s32.totalorder %s56, %s57
      %p69 = scmp.eq.s32.totalorder %s26, 1
      %p70 = por %p68, %p69
      %p72 = scmp.ne.s32.totalorder %s57, %s71
      %p73 = scmp.eq.s32.totalorder %s26, 0
      %p74 = por %p72, %p73
      %s76 = sadd.s32 %s75, 1
      %p79 = scmp.eq.s32.totalorder %s20, 1
      %p80 = scmp.ne.s32.totalorder %s75, %s77
      %p81 = scmp.eq.s32.totalorder %s20, 0
      %p82 = por %p80, %p81
      %p83 = scmp.ne.s32.totalorder %s75, %s77
      %p84 = scmp.eq.s32.totalorder %s25, 1
      %p85 = por %p83, %p84
      %p86 = scmp.ne.s32.totalorder %s77, %s78
      %p87 = scmp.eq.s32.totalorder %s25, 0
      %p88 = por %p86, %p87
      %p89 = scmp.ne.s32.totalorder %s77, %s78
      %p90 = scmp.eq.s32.totalorder %s26, 1
      %p91 = por %p89, %p90
      %p93 = scmp.ne.s32.totalorder %s78, %s92
      %p94 = scmp.eq.s32.totalorder %s26, 0
      %p95 = por %p93, %p94
      %s97 = sadd.s32 %s96, 1
      %p100 = scmp.eq.s32.totalorder %s20, 1
      %p101 = scmp.ne.s32.totalorder %s96, %s98
      %p102 = scmp.eq.s32.totalorder %s20, 0
      %p103 = por %p101, %p102
      %p104 = scmp.ne.s32.totalorder %s96, %s98
      %p105 = scmp.eq.s32.totalorder %s25, 1
      %p106 = por %p104, %p105
      %p107 = scmp.ne.s32.totalorder %s98, %s99
      %p108 = scmp.eq.s32.totalorder %s25, 0
      %p109 = por %p107, %p108
      %p110 = scmp.ne.s32.totalorder %s98, %s99
      %p111 = scmp.eq.s32.totalorder %s26, 1
      %p112 = por %p110, %p111
      %p114 = scmp.ne.s32.totalorder %s99, %s113
      %p115 = scmp.eq.s32.totalorder %s26, 0
      %p116 = por %p114, %p115
      %s118 = sadd.s32 %s117, 1
      %p121 = scmp.eq.s32.totalorder %s20, 1
      %p122 = scmp.ne.s32.totalorder %s117, %s119
      %p123 = scmp.eq.s32.totalorder %s20, 0
      %p124 = por %p122, %p123
      %p125 = scmp.ne.s32.totalorder %s117, %s119
      %p126 = scmp.eq.s32.totalorder %s25, 1
      %p127 = por %p125, %p126
      %p128 = scmp.ne.s32.totalorder %s119, %s120
      %p129 = scmp.eq.s32.totalorder %s25, 0
      %p130 = por %p128, %p129
      %p131 = scmp.ne.s32.totalorder %s119, %s120
      %p132 = scmp.eq.s32.totalorder %s26, 1
      %p133 = por %p131, %p132
      %p135 = scmp.ne.s32.totalorder %s120, %s134
      %p136 = scmp.eq.s32.totalorder %s26, 0
      %p137 = por %p135, %p136
      %s139 = sadd.s32 %s138, 1
      %p142 = scmp.eq.s32.totalorder %s20, 1
      %p143 = scmp.ne.s32.totalorder %s138, %s140
      %p144 = scmp.eq.s32.totalorder %s20, 0
      %p145 = por %p143, %p144
      %p146 = scmp.ne.s32.totalorder %s138, %s140
      %p147 = scmp.eq.s32.totalorder %s25, 1
      %p148 = por %p146, %p147
      %p149 = scmp.ne.s32.totalorder %s140, %s141
      %p150 = scmp.eq.s32.totalorder %s25, 0
      %p151 = por %p149, %p150
      %p152 = scmp.ne.s32.totalorder %s140, %s141
      %p153 = scmp.eq.s32.totalorder %s26, 1
      %p154 = por %p152, %p153
      %p156 = scmp.ne.s32.totalorder %s141, %s155
      %p157 = scmp.eq.s32.totalorder %s26, 0
      %p158 = por %p156, %p157
      %s159 = ssub.s32 %s20, %s27
      %p160 = scmp.eq.s32.totalorder %s159, 0
      %s162 = sadd.s32 %s161, 1
      %s163 = scalar_select %p160, %s161, %s162
      %p166 = pneg %p160
      %p167 = scmp.eq.s32.totalorder %s20, 1
      %p168 = por %p166, %p167
      %p169 = scmp.ne.s32.totalorder %s161, %s164
      %p170 = scmp.eq.s32.totalorder %s20, 0
      %p171 = por %p169, %p170
      %p172 = scmp.ne.s32.totalorder %s161, %s164
      %p173 = scmp.eq.s32.totalorder %s25, 1
      %p174 = por %p172, %p173
      %p175 = scmp.ne.s32.totalorder %s164, %s165
      %p176 = scmp.eq.s32.totalorder %s25, 0
      %p177 = por %p175, %p176
      %p178 = scmp.ne.s32.totalorder %s164, %s165
      %p179 = scmp.eq.s32.totalorder %s26, 1
      %p180 = por %p178, %p179
      %p182 = scmp.ne.s32.totalorder %s165, %s181
      %p183 = scmp.eq.s32.totalorder %s26, 0
      %p184 = por %p182, %p183
      %p185 = scmp.le.s32.totalorder 1, %s20
      %p186 = scmp.lt.s32.totalorder %s20, 3
      %p187 = pnand %p185, %p186
      %p188 = pneg %p187
      // Predicated region
      $region9: #{tpu_custom_call.1} parent=5 // pred_check
        _
      $region10: #{tpu_custom_call.1} parent=5 // pred_check_branch
        %190 = sbr.rel (%p187) target = $region12
      $region11: #{tpu_custom_call.1} parent=5 // pred_region
        %s191 = ssub.s32 %s20, 1
        // Predicated region
        $region13: #{tpu_custom_call.1} parent=11 // pred_check
          %p192 = pneg %p67
        $region14: #{tpu_custom_call.1} parent=11 // pred_check_branch
          %194 = sbr.rel (%p192) target = $region16
        $region15: #{tpu_custom_call.1} parent=11 // pred_region
          %196 = vsyncadd [#allocation6], 0
          %s197 = sshll.u32 %s1, 4
          %s198 = int_to_ptr.hbm [resolvable:$true] %s197
          %s199 = sshll.u32 [#allocation5], 4
          %s200 = int_to_ptr.vmem [resolvable:$true] %s199
          %205 = dma.hbm_to_vmem [thread:$0]  %s198, 8192, %s200, [#allocation6], 256, 256, 16
        $region16: #{tpu_custom_call.1} parent=11 // pred_fallthru
          _
        // Predicated region
        $region17: #{tpu_custom_call.1} parent=11 // pred_check
          %p206 = pneg %p88
        $region18: #{tpu_custom_call.1} parent=11 // pred_check_branch
          %208 = sbr.rel (%p206) target = $region20
        $region19: #{tpu_custom_call.1} parent=11 // pred_region
          %210 = vsyncadd [#allocation6], 0
          %s211 = sshll.u32 %s2, 4
          %s212 = int_to_ptr.hbm [resolvable:$true] %s211
          %s213 = sshll.u32 [#allocation7], 4
          %s214 = int_to_ptr.vmem [resolvable:$true] %s213
          %219 = dma.hbm_to_vmem [thread:$0]  %s212, 8192, %s214, [#allocation6], 256, 256, 16
        $region20: #{tpu_custom_call.1} parent=11 // pred_fallthru
          _
        // Predicated region
        $region21: #{tpu_custom_call.1} parent=11 // pred_check
          %p220 = pneg %p109
        $region22: #{tpu_custom_call.1} parent=11 // pred_check_branch
          %222 = sbr.rel (%p220) target = $region24
        $region23: #{tpu_custom_call.1} parent=11 // pred_region
          %224 = vsyncadd [#allocation9], 0
          %s225 = sshll.u32 %s3, 4
          %s226 = int_to_ptr.hbm [resolvable:$true] %s225
          %s227 = sshll.u32 [#allocation8], 4
          %s228 = int_to_ptr.vmem [resolvable:$true] %s227
          %233 = dma.hbm_to_vmem [thread:$0]  %s226, 2048, %s228, [#allocation9], 256, 256, 16
        $region24: #{tpu_custom_call.1} parent=11 // pred_fallthru
          _
        // Predicated region
        $region25: #{tpu_custom_call.1} parent=11 // pred_check
          %p234 = pneg %p130
        $region26: #{tpu_custom_call.1} parent=11 // pred_check_branch
          %236 = sbr.rel (%p234) target = $region28
        $region27: #{tpu_custom_call.1} parent=11 // pred_region
          _
        $region28: #{tpu_custom_call.1} parent=11 // pred_fallthru
          _
        // Predicated region
        $region29: #{tpu_custom_call.1} parent=11 // pred_check
          %p237 = pneg %p151
        $region30: #{tpu_custom_call.1} parent=11 // pred_check_branch
          %239 = sbr.rel (%p237) target = $region32
        $region31: #{tpu_custom_call.1} parent=11 // pred_region
          _
        $region32: #{tpu_custom_call.1} parent=11 // pred_fallthru
          _
      $region12: #{tpu_custom_call.1} parent=5 // pred_fallthru
        _
      %p240 = scmp.lt.s32.totalorder %s20, 2
      // Predicated region
      $region33: #{tpu_custom_call.1} parent=5 // pred_check
        %p241 = pneg %p240
      $region34: #{tpu_custom_call.1} parent=5 // pred_check_branch
        %243 = sbr.rel (%p241) target = $region36
      $region35: #{tpu_custom_call.1} parent=5 // pred_region
        // Predicated region
        $region37: #{tpu_custom_call.1} parent=35 // pred_check
          %p244 = pneg %p40
        $region38: #{tpu_custom_call.1} parent=35 // pred_check_branch
          %246 = sbr.rel (%p244) target = $region40
        $region39: #{tpu_custom_call.1} parent=35 // pred_region
          %s247 = sand.u32 %s30, 1
          %s248 = scalar_lea.sflag [#allocation3], %s247
          %s249 = sand.u32 %s30, 1
          %s250 = smul.addr %s249, 128
          %s251 = scalar_lea.vmem [#allocation2], %s250
          %253 = vsyncadd %s248, 0
          %s254 = smul.addr %s20, 16
          %s255 = smul.addr %s254, 8
          %s256 = scalar_lea.hbm %s0, %s255
          %s257 = sshll.u32 %s256, 4
          %s258 = int_to_ptr.hbm [resolvable:$true] %s257
          %s259 = sshll.u32 %s251, 4
          %s260 = int_to_ptr.vmem [resolvable:$true] %s259
          %265 = dma.hbm_to_vmem [thread:$0]  %s258, 2048, %s260, %s248, 256, 256, 16
        $region40: #{tpu_custom_call.1} parent=35 // pred_fallthru
          _
      $region36: #{tpu_custom_call.1} parent=5 // pred_fallthru
        _
      %p266 = scmp.le.s32.totalorder 1, %s20
      %p267 = scmp.lt.s32.totalorder %s20, 3
      %p268 = pnand %p266, %p267
      %p269 = pneg %p268
      // Predicated region
      $region41: #{tpu_custom_call.1} parent=5 // pred_check
        _
      $region42: #{tpu_custom_call.1} parent=5 // pred_check_branch
        %271 = sbr.rel (%p268) target = $region44
      $region43: #{tpu_custom_call.1} parent=5 // pred_region
        %s272 = ssub.s32 %s20, 1
        %s273 = sand.u32 %s33, 1
        %s274 = scalar_lea.sflag [#allocation3], %s273
        %s275 = sand.u32 %s33, 1
        %s276 = smul.addr %s275, 128
        %s277 = scalar_lea.vmem [#allocation2], %s276
        // Predicated region
        $region45: #{tpu_custom_call.1} parent=43 // pred_check
          %p278 = pneg %p46
        $region46: #{tpu_custom_call.1} parent=43 // pred_check_branch
          %280 = sbr.rel (%p278) target = $region48
        $region47: #{tpu_custom_call.1} parent=43 // pred_region
          %282 = dma.done %s274, 2048
        $region48: #{tpu_custom_call.1} parent=43 // pred_fallthru
          _
        // Predicated region
        $region49: #{tpu_custom_call.1} parent=43 // pred_check
          %p283 = pneg %p67
        $region50: #{tpu_custom_call.1} parent=43 // pred_check_branch
          %285 = sbr.rel (%p283) target = $region52
        $region51: #{tpu_custom_call.1} parent=43 // pred_region
          %287 = dma.done [#allocation6], 8192
        $region52: #{tpu_custom_call.1} parent=43 // pred_fallthru
          _
        // Predicated region
        $region53: #{tpu_custom_call.1} parent=43 // pred_check
          %p288 = pneg %p88
        $region54: #{tpu_custom_call.1} parent=43 // pred_check_branch
          %290 = sbr.rel (%p288) target = $region56
        $region55: #{tpu_custom_call.1} parent=43 // pred_region
          %292 = dma.done [#allocation6], 8192
        $region56: #{tpu_custom_call.1} parent=43 // pred_fallthru
          _
        // Predicated region
        $region57: #{tpu_custom_call.1} parent=43 // pred_check
          %p293 = pneg %p109
        $region58: #{tpu_custom_call.1} parent=43 // pred_check_branch
          %295 = sbr.rel (%p293) target = $region60
        $region59: #{tpu_custom_call.1} parent=43 // pred_region
          %297 = dma.done [#allocation9], 2048
        $region60: #{tpu_custom_call.1} parent=43 // pred_fallthru
          _
        %s298 = sand.u32 %s33, 1
        %s299 = scalar_lea.sflag [#allocation3], %s298
        %s300 = sand.u32 %s33, 1
        %s301 = smul.addr %s300, 128
        %s302 = scalar_lea.vmem [#allocation2], %s301
        %p303 = pneg %p46
        %p304 = pneg %p43
        %p305 = pneg %p67
        %p306 = pneg %p64
        %p307 = pneg %p88
        %p308 = pneg %p85
        %p309 = pneg %p109
        %p310 = pneg %p106
        %p311 = pneg %p130
        %p312 = pneg %p127
        %p313 = pneg %p151
        %p314 = pneg %p148
        %p315 = pneg %p177
        %p316 = pneg %p174
        %s317 = sand.u32 %s164, 1
        %s318 = scalar_lea.sflag [#allocation4], %s317
        %s319 = sand.u32 %s164, 1
        %s320 = smul.addr %s319, 128
        %s321 = scalar_lea.vmem [#allocation10], %s320
        %v322 = vld [vmem:[%s277] sm:$0xff]
        %v323 = vld [vmem:[%s277 + $0x8] sm:$0xff]
        %v324 = vld [vmem:[%s277 + $0x10] sm:$0xff]
        %v325 = vld [vmem:[%s277 + $0x18] sm:$0xff]
        %v326 = vld [vmem:[%s277 + $0x20] sm:$0xff]
        %v327 = vld [vmem:[%s277 + $0x28] sm:$0xff]
        %v328 = vld [vmem:[%s277 + $0x30] sm:$0xff]
        %v329 = vld [vmem:[%s277 + $0x38] sm:$0xff]
        %v330 = vld [vmem:[%s277 + $0x40] sm:$0xff]
        %v331 = vld [vmem:[%s277 + $0x48] sm:$0xff]
        %v332 = vld [vmem:[%s277 + $0x50] sm:$0xff]
        %v333 = vld [vmem:[%s277 + $0x58] sm:$0xff]
        %v334 = vld [vmem:[%s277 + $0x60] sm:$0xff]
        %v335 = vld [vmem:[%s277 + $0x68] sm:$0xff]
        %v336 = vld [vmem:[%s277 + $0x70] sm:$0xff]
        %v337 = vld [vmem:[%s277 + $0x78] sm:$0xff]
        %v338 = vadd.f32 %v322, %v324
        %v339 = vadd.f32 %v338, %v326
        %v340 = vadd.f32 %v339, %v328
        %v341 = vadd.f32 %v340, %v330
        %v342 = vadd.f32 %v341, %v332
        %v343 = vadd.f32 %v342, %v334
        %v344 = vadd.f32 %v343, %v336
        %v345 = vrot.slane %v344, 4
        %v346 = vadd.f32 %v344, %v345
        %v347 = vrot.slane %v346, 2
        %v348 = vadd.f32 %v346, %v347
        %v349 = vrot.slane %v348, 1
        %v350 = vadd.f32 %v348, %v349
        %v351 = vadd.f32 %v323, %v325
        %v352 = vadd.f32 %v351, %v327
        %v353 = vadd.f32 %v352, %v329
        %v354 = vadd.f32 %v353, %v331
        %v355 = vadd.f32 %v354, %v333
        %v356 = vadd.f32 %v355, %v335
        %v357 = vadd.f32 %v356, %v337
        %v358 = vrot.slane %v357, 4
        %v359 = vadd.f32 %v357, %v358
        %v360 = vrot.slane %v359, 2
        %v361 = vadd.f32 %v359, %v360
        %v362 = vrot.slane %v361, 1
        %v363 = vadd.f32 %v361, %v362
        %v364 = vrcp.pop 64.0
        %v365 = vmul.f32 64.0, %v364
        %v366 = vsub.f32 1.0, %v365
        %v367 = vmul.f32 %v364, %v366
        %v368 = vadd.f32 %v364, %v367
        %vm369 = vweird.f32 %v364
        %v370 = vsel %vm369, %v364, %v368
        %v371 = vmul.f32 %v350, %v370
        %v372 = vmul.f32 %v363, %v370
        %v373 = vmax.f32 %v322, %v326
        %v374 = vmax.f32 %v324, %v328
        %v375 = vmax.f32 %v373, %v330
        %v376 = vmax.f32 %v374, %v332
        %v377 = vmax.f32 %v375, %v334
        %v378 = vmax.f32 %v376, %v336
        %v379 = vmax.f32 %v377, %v378
        %v380 = vrot.slane %v379, 4
        %v381 = vmax.f32 %v379, %v380
        %v382 = vrot.slane %v381, 2
        %v383 = vmax.f32 %v381, %v382
        %v384 = vrot.slane %v383, 1
        %v385 = vmax.f32 %v383, %v384
        %v386 = vmax.f32 %v323, %v327
        %v387 = vmax.f32 %v325, %v329
        %v388 = vmax.f32 %v386, %v331
        %v389 = vmax.f32 %v387, %v333
        %v390 = vmax.f32 %v388, %v335
        %v391 = vmax.f32 %v389, %v337
        %v392 = vmax.f32 %v390, %v391
        %v393 = vrot.slane %v392, 4
        %v394 = vmax.f32 %v392, %v393
        %v395 = vrot.slane %v394, 2
        %v396 = vmax.f32 %v394, %v395
        %v397 = vrot.slane %v396, 1
        %v398 = vmax.f32 %v396, %v397
        %v399 = vld [vmem:[#allocation5] sm:$0xff]
        %v400 = vld [vmem:[#allocation5 + $0x8] sm:$0xff]
        %v401 = vld [vmem:[#allocation5 + $0x10] sm:$0xff]
        %v402 = vld [vmem:[#allocation5 + $0x18] sm:$0xff]
        %v403 = vld [vmem:[#allocation5 + $0x20] sm:$0xff]
        %v404 = vld [vmem:[#allocation5 + $0x28] sm:$0xff]
        %v405 = vld [vmem:[#allocation5 + $0x30] sm:$0xff]
        %v406 = vld [vmem:[#allocation5 + $0x38] sm:$0xff]
        %v407 = vld [vmem:[#allocation5 + $0x40] sm:$0xff]
        %v408 = vld [vmem:[#allocation5 + $0x48] sm:$0xff]
        %v409 = vld [vmem:[#allocation5 + $0x50] sm:$0xff]
        %v410 = vld [vmem:[#allocation5 + $0x58] sm:$0xff]
        %v411 = vld [vmem:[#allocation5 + $0x60] sm:$0xff]
        %v412 = vld [vmem:[#allocation5 + $0x68] sm:$0xff]
        %v413 = vld [vmem:[#allocation5 + $0x70] sm:$0xff]
        %v414 = vld [vmem:[#allocation5 + $0x78] sm:$0xff]
        %v415 = vld [vmem:[#allocation5 + $0x80] sm:$0xff]
        %v416 = vld [vmem:[#allocation5 + $0x88] sm:$0xff]
        %v417 = vld [vmem:[#allocation5 + $0x90] sm:$0xff]
        %v418 = vld [vmem:[#allocation5 + $0x98] sm:$0xff]
        %v419 = vld [vmem:[#allocation5 + $0xa0] sm:$0xff]
        %v420 = vld [vmem:[#allocation5 + $0xa8] sm:$0xff]
        %v421 = vld [vmem:[#allocation5 + $0xb0] sm:$0xff]
        %v422 = vld [vmem:[#allocation5 + $0xb8] sm:$0xff]
        %v423 = vld [vmem:[#allocation5 + $0xc0] sm:$0xff]
        %v424 = vld [vmem:[#allocation5 + $0xc8] sm:$0xff]
        %v425 = vld [vmem:[#allocation5 + $0xd0] sm:$0xff]
        %v426 = vld [vmem:[#allocation5 + $0xd8] sm:$0xff]
        %v427 = vld [vmem:[#allocation5 + $0xe0] sm:$0xff]
        %v428 = vld [vmem:[#allocation5 + $0xe8] sm:$0xff]
        %v429 = vld [vmem:[#allocation5 + $0xf0] sm:$0xff]
        %v430 = vld [vmem:[#allocation5 + $0xf8] sm:$0xff]
        %v431 = vld [vmem:[#allocation5 + $0x100] sm:$0xff]
        %v432 = vld [vmem:[#allocation5 + $0x108] sm:$0xff]
        %v433 = vld [vmem:[#allocation5 + $0x110] sm:$0xff]
        %v434 = vld [vmem:[#allocation5 + $0x118] sm:$0xff]
        %v435 = vld [vmem:[#allocation5 + $0x120] sm:$0xff]
        %v436 = vld [vmem:[#allocation5 + $0x128] sm:$0xff]
        %v437 = vld [vmem:[#allocation5 + $0x130] sm:$0xff]
        %v438 = vld [vmem:[#allocation5 + $0x138] sm:$0xff]
        %v439 = vld [vmem:[#allocation5 + $0x140] sm:$0xff]
        %v440 = vld [vmem:[#allocation5 + $0x148] sm:$0xff]
        %v441 = vld [vmem:[#allocation5 + $0x150] sm:$0xff]
        %v442 = vld [vmem:[#allocation5 + $0x158] sm:$0xff]
        %v443 = vld [vmem:[#allocation5 + $0x160] sm:$0xff]
        %v444 = vld [vmem:[#allocation5 + $0x168] sm:$0xff]
        %v445 = vld [vmem:[#allocation5 + $0x170] sm:$0xff]
        %v446 = vld [vmem:[#allocation5 + $0x178] sm:$0xff]
        %v447 = vld [vmem:[#allocation5 + $0x180] sm:$0xff]
        %v448 = vld [vmem:[#allocation5 + $0x188] sm:$0xff]
        %v449 = vld [vmem:[#allocation5 + $0x190] sm:$0xff]
        %v450 = vld [vmem:[#allocation5 + $0x198] sm:$0xff]
        %v451 = vld [vmem:[#allocation5 + $0x1a0] sm:$0xff]
        %v452 = vld [vmem:[#allocation5 + $0x1a8] sm:$0xff]
        %v453 = vld [vmem:[#allocation5 + $0x1b0] sm:$0xff]
        %v454 = vld [vmem:[#allocation5 + $0x1b8] sm:$0xff]
        %v455 = vld [vmem:[#allocation5 + $0x1c0] sm:$0xff]
        %v456 = vld [vmem:[#allocation5 + $0x1c8] sm:$0xff]
        %v457 = vld [vmem:[#allocation5 + $0x1d0] sm:$0xff]
        %v458 = vld [vmem:[#allocation5 + $0x1d8] sm:$0xff]
        %v459 = vld [vmem:[#allocation5 + $0x1e0] sm:$0xff]
        %v460 = vld [vmem:[#allocation5 + $0x1e8] sm:$0xff]
        %v461 = vld [vmem:[#allocation5 + $0x1f0] sm:$0xff]
        %v462 = vld [vmem:[#allocation5 + $0x1f8] sm:$0xff]
        %v463 = vld [vmem:[#allocation7] sm:$0xff]
        %v464 = vld [vmem:[#allocation7 + $0x8] sm:$0xff]
        %v465 = vld [vmem:[#allocation7 + $0x10] sm:$0xff]
        %v466 = vld [vmem:[#allocation7 + $0x18] sm:$0xff]
        %v467 = vld [vmem:[#allocation7 + $0x20] sm:$0xff]
        %v468 = vld [vmem:[#allocation7 + $0x28] sm:$0xff]
        %v469 = vld [vmem:[#allocation7 + $0x30] sm:$0xff]
        %v470 = vld [vmem:[#allocation7 + $0x38] sm:$0xff]
        %v471 = vld [vmem:[#allocation7 + $0x40] sm:$0xff]
        %v472 = vld [vmem:[#allocation7 + $0x48] sm:$0xff]
        %v473 = vld [vmem:[#allocation7 + $0x50] sm:$0xff]
        %v474 = vld [vmem:[#allocation7 + $0x58] sm:$0xff]
        %v475 = vld [vmem:[#allocation7 + $0x60] sm:$0xff]
        %v476 = vld [vmem:[#allocation7 + $0x68] sm:$0xff]
        %v477 = vld [vmem:[#allocation7 + $0x70] sm:$0xff]
        %v478 = vld [vmem:[#allocation7 + $0x78] sm:$0xff]
        %v479 = vld [vmem:[#allocation7 + $0x80] sm:$0xff]
        %v480 = vld [vmem:[#allocation7 + $0x88] sm:$0xff]
        %v481 = vld [vmem:[#allocation7 + $0x90] sm:$0xff]
        %v482 = vld [vmem:[#allocation7 + $0x98] sm:$0xff]
        %v483 = vld [vmem:[#allocation7 + $0xa0] sm:$0xff]
        %v484 = vld [vmem:[#allocation7 + $0xa8] sm:$0xff]
        %v485 = vld [vmem:[#allocation7 + $0xb0] sm:$0xff]
        %v486 = vld [vmem:[#allocation7 + $0xb8] sm:$0xff]
        %v487 = vld [vmem:[#allocation7 + $0xc0] sm:$0xff]
        %v488 = vld [vmem:[#allocation7 + $0xc8] sm:$0xff]
        %v489 = vld [vmem:[#allocation7 + $0xd0] sm:$0xff]
        %v490 = vld [vmem:[#allocation7 + $0xd8] sm:$0xff]
        %v491 = vld [vmem:[#allocation7 + $0xe0] sm:$0xff]
        %v492 = vld [vmem:[#allocation7 + $0xe8] sm:$0xff]
        %v493 = vld [vmem:[#allocation7 + $0xf0] sm:$0xff]
        %v494 = vld [vmem:[#allocation7 + $0xf8] sm:$0xff]
        %v495 = vld [vmem:[#allocation7 + $0x100] sm:$0xff]
        %v496 = vld [vmem:[#allocation7 + $0x108] sm:$0xff]
        %v497 = vld [vmem:[#allocation7 + $0x110] sm:$0xff]
        %v498 = vld [vmem:[#allocation7 + $0x118] sm:$0xff]
        %v499 = vld [vmem:[#allocation7 + $0x120] sm:$0xff]
        %v500 = vld [vmem:[#allocation7 + $0x128] sm:$0xff]
        %v501 = vld [vmem:[#allocation7 + $0x130] sm:$0xff]
        %v502 = vld [vmem:[#allocation7 + $0x138] sm:$0xff]
        %v503 = vld [vmem:[#allocation7 + $0x140] sm:$0xff]
        %v504 = vld [vmem:[#allocation7 + $0x148] sm:$0xff]
        %v505 = vld [vmem:[#allocation7 + $0x150] sm:$0xff]
        %v506 = vld [vmem:[#allocation7 + $0x158] sm:$0xff]
        %v507 = vld [vmem:[#allocation7 + $0x160] sm:$0xff]
        %v508 = vld [vmem:[#allocation7 + $0x168] sm:$0xff]
        %v509 = vld [vmem:[#allocation7 + $0x170] sm:$0xff]
        %v510 = vld [vmem:[#allocation7 + $0x178] sm:$0xff]
        %v511 = vld [vmem:[#allocation7 + $0x180] sm:$0xff]
        %v512 = vld [vmem:[#allocation7 + $0x188] sm:$0xff]
        %v513 = vld [vmem:[#allocation7 + $0x190] sm:$0xff]
        %v514 = vld [vmem:[#allocation7 + $0x198] sm:$0xff]
        %v515 = vld [vmem:[#allocation7 + $0x1a0] sm:$0xff]
        %v516 = vld [vmem:[#allocation7 + $0x1a8] sm:$0xff]
        %v517 = vld [vmem:[#allocation7 + $0x1b0] sm:$0xff]
        %v518 = vld [vmem:[#allocation7 + $0x1b8] sm:$0xff]
        %v519 = vld [vmem:[#allocation7 + $0x1c0] sm:$0xff]
        %v520 = vld [vmem:[#allocation7 + $0x1c8] sm:$0xff]
        %v521 = vld [vmem:[#allocation7 + $0x1d0] sm:$0xff]
        %v522 = vld [vmem:[#allocation7 + $0x1d8] sm:$0xff]
        %v523 = vld [vmem:[#allocation7 + $0x1e0] sm:$0xff]
        %v524 = vld [vmem:[#allocation7 + $0x1e8] sm:$0xff]
        %v525 = vld [vmem:[#allocation7 + $0x1f0] sm:$0xff]
        %v526 = vld [vmem:[#allocation7 + $0x1f8] sm:$0xff]
        %527 = vmatpush.msra.mxu0 %v493
        %528 = vmatpush.msra.mxu0 %v491
        %529 = vmatpush.msra.mxu0 %v489
        %530 = vmatpush.msra.mxu0 %v487
        %531 = vmatpush.msra.mxu0 %v485
        %532 = vmatpush.msra.mxu0 %v483
        %533 = vmatpush.msra.mxu0 %v481
        %534 = vmatpush.msra.mxu0 %v479
        %535 = vmatpush.msra.mxu0 %v477
        %536 = vmatpush.msra.mxu0 %v475
        %537 = vmatpush.msra.mxu0 %v473
        %538 = vmatpush.msra.mxu0 %v471
        %539 = vmatpush.msra.mxu0 %v469
        %540 = vmatpush.msra.mxu0 %v467
        %541 = vmatpush.msra.mxu0 %v465
        %542 = vmatpush.msra.mxu0 %v463
        %543 = vmatmul.f32.gmra.mxu0 %v385
        %v544 = vpop.f32.mrf.mxu0
        %v545 = vadd.f32 0.0, %v544
        %546 = vdwg.mxu0
        %547 = vmatpush.msra.mxu0 %v525
        %548 = vmatpush.msra.mxu0 %v523
        %549 = vmatpush.msra.mxu0 %v521
        %550 = vmatpush.msra.mxu0 %v519
        %551 = vmatpush.msra.mxu0 %v517
        %552 = vmatpush.msra.mxu0 %v515
        %553 = vmatpush.msra.mxu0 %v513
        %554 = vmatpush.msra.mxu0 %v511
        %555 = vmatpush.msra.mxu0 %v509
        %556 = vmatpush.msra.mxu0 %v507
        %557 = vmatpush.msra.mxu0 %v505
        %558 = vmatpush.msra.mxu0 %v503
        %559 = vmatpush.msra.mxu0 %v501
        %560 = vmatpush.msra.mxu0 %v499
        %561 = vmatpush.msra.mxu0 %v497
        %562 = vmatpush.msra.mxu0 %v495
        %563 = vmatmul.f32.gmra.mxu0 %v398
        %v564 = vpop.f32.mrf.mxu0
        %v565 = vadd.f32 %v545, %v564
        %566 = vdwg.mxu0
        %567 = vmatpush.msra.mxu0 %v494
        %568 = vmatpush.msra.mxu0 %v492
        %569 = vmatpush.msra.mxu0 %v490
        %570 = vmatpush.msra.mxu0 %v488
        %571 = vmatpush.msra.mxu0 %v486
        %572 = vmatpush.msra.mxu0 %v484
        %573 = vmatpush.msra.mxu0 %v482
        %574 = vmatpush.msra.mxu0 %v480
        %575 = vmatpush.msra.mxu0 %v478
        %576 = vmatpush.msra.mxu0 %v476
        %577 = vmatpush.msra.mxu0 %v474
        %578 = vmatpush.msra.mxu0 %v472
        %579 = vmatpush.msra.mxu0 %v470
        %580 = vmatpush.msra.mxu0 %v468
        %581 = vmatpush.msra.mxu0 %v466
        %582 = vmatpush.msra.mxu0 %v464
        %583 = vmatmul.f32.gmra.mxu0 %v385
        %v584 = vpop.f32.mrf.mxu0
        %v585 = vadd.f32 0.0, %v584
        %586 = vdwg.mxu0
        %587 = vmatpush.msra.mxu0 %v526
        %588 = vmatpush.msra.mxu0 %v524
        %589 = vmatpush.msra.mxu0 %v522
        %590 = vmatpush.msra.mxu0 %v520
        %591 = vmatpush.msra.mxu0 %v518
        %592 = vmatpush.msra.mxu0 %v516
        %593 = vmatpush.msra.mxu0 %v514
        %594 = vmatpush.msra.mxu0 %v512
        %595 = vmatpush.msra.mxu0 %v510
        %596 = vmatpush.msra.mxu0 %v508
        %597 = vmatpush.msra.mxu0 %v506
        %598 = vmatpush.msra.mxu0 %v504
        %599 = vmatpush.msra.mxu0 %v502
        %600 = vmatpush.msra.mxu0 %v500
        %601 = vmatpush.msra.mxu0 %v498
        %602 = vmatpush.msra.mxu0 %v496
        %603 = vmatmul.f32.gmra.mxu0 %v398
        %v604 = vpop.f32.mrf.mxu0
        %v605 = vadd.f32 %v585, %v604
        %606 = vdwg.mxu0
        %607 = vmatpush.msra.mxu0 %v429
        %608 = vmatpush.msra.mxu0 %v427
        %609 = vmatpush.msra.mxu0 %v425
        %610 = vmatpush.msra.mxu0 %v423
        %611 = vmatpush.msra.mxu0 %v421
        %612 = vmatpush.msra.mxu0 %v419
        %613 = vmatpush.msra.mxu0 %v417
        %614 = vmatpush.msra.mxu0 %v415
        %615 = vmatpush.msra.mxu0 %v413
        %616 = vmatpush.msra.mxu0 %v411
        %617 = vmatpush.msra.mxu0 %v409
        %618 = vmatpush.msra.mxu0 %v407
        %619 = vmatpush.msra.mxu0 %v405
        %620 = vmatpush.msra.mxu0 %v403
        %621 = vmatpush.msra.mxu0 %v401
        %622 = vmatpush.msra.mxu0 %v399
        %623 = vmatmul.f32.gmra.mxu0 %v371
        %v624 = vpop.f32.mrf.mxu0
        %v625 = vadd.f32 %v565, %v624
        %626 = vdwg.mxu0
        %627 = vmatpush.msra.mxu0 %v461
        %628 = vmatpush.msra.mxu0 %v459
        %629 = vmatpush.msra.mxu0 %v457
        %630 = vmatpush.msra.mxu0 %v455
        %631 = vmatpush.msra.mxu0 %v453
        %632 = vmatpush.msra.mxu0 %v451
        %633 = vmatpush.msra.mxu0 %v449
        %634 = vmatpush.msra.mxu0 %v447
        %635 = vmatpush.msra.mxu0 %v445
        %636 = vmatpush.msra.mxu0 %v443
        %637 = vmatpush.msra.mxu0 %v441
        %638 = vmatpush.msra.mxu0 %v439
        %639 = vmatpush.msra.mxu0 %v437
        %640 = vmatpush.msra.mxu0 %v435
        %641 = vmatpush.msra.mxu0 %v433
        %642 = vmatpush.msra.mxu0 %v431
        %643 = vmatmul.f32.gmra.mxu0 %v372
        %v644 = vpop.f32.mrf.mxu0
        %v645 = vadd.f32 %v625, %v644
        %646 = vdwg.mxu0
        %647 = vmatpush.msra.mxu0 %v430
        %648 = vmatpush.msra.mxu0 %v428
        %649 = vmatpush.msra.mxu0 %v426
        %650 = vmatpush.msra.mxu0 %v424
        %651 = vmatpush.msra.mxu0 %v422
        %652 = vmatpush.msra.mxu0 %v420
        %653 = vmatpush.msra.mxu0 %v418
        %654 = vmatpush.msra.mxu0 %v416
        %655 = vmatpush.msra.mxu0 %v414
        %656 = vmatpush.msra.mxu0 %v412
        %657 = vmatpush.msra.mxu0 %v410
        %658 = vmatpush.msra.mxu0 %v408
        %659 = vmatpush.msra.mxu0 %v406
        %660 = vmatpush.msra.mxu0 %v404
        %661 = vmatpush.msra.mxu0 %v402
        %662 = vmatpush.msra.mxu0 %v400
        %663 = vmatmul.f32.gmra.mxu0 %v371
        %v664 = vpop.f32.mrf.mxu0
        %v665 = vadd.f32 %v605, %v664
        %666 = vdwg.mxu0
        %667 = vmatpush.msra.mxu0 %v462
        %668 = vmatpush.msra.mxu0 %v460
        %669 = vmatpush.msra.mxu0 %v458
        %670 = vmatpush.msra.mxu0 %v456
        %671 = vmatpush.msra.mxu0 %v454
        %672 = vmatpush.msra.mxu0 %v452
        %673 = vmatpush.msra.mxu0 %v450
        %674 = vmatpush.msra.mxu0 %v448
        %675 = vmatpush.msra.mxu0 %v446
        %676 = vmatpush.msra.mxu0 %v444
        %677 = vmatpush.msra.mxu0 %v442
        %678 = vmatpush.msra.mxu0 %v440
        %679 = vmatpush.msra.mxu0 %v438
        %680 = vmatpush.msra.mxu0 %v436
        %681 = vmatpush.msra.mxu0 %v434
        %682 = vmatpush.msra.mxu0 %v432
        %683 = vmatmul.f32.gmra.mxu0 %v372
        %v684 = vpop.f32.mrf.mxu0
        %v685 = vadd.f32 %v665, %v684
        %686 = vdwg.mxu0
        %v687 = vsub.f32 0.0, %v645
        %v688 = vsub.f32 0.0, %v685
        %v689 = vmul.f32 %v687, 1.442695
        %v690 = vpow.pop %v689
        %v691 = vmul.f32 %v688, 1.442695
        %v692 = vpow.pop %v691
        %v693 = vadd.f32 %v690, 1.0
        %v694 = vadd.f32 %v692, 1.0
        %v695 = vrcp.pop %v693
        %v696 = vmul.f32 %v693, %v695
        %v697 = vsub.f32 1.0, %v696
        %v698 = vmul.f32 %v695, %v697
        %v699 = vadd.f32 %v695, %v698
        %vm700 = vweird.f32 %v693
        %vm701 = vweird.f32 %v695
        %vm702 = vmor %vm700, %vm701
        %v703 = vsel %vm702, %v695, %v699
        %v704 = vand.u32 2147483647, %v693
        %vm705 = vcmp.eq.f32.partialorder %v704, 8.507059e+37
        %v706 = vand.u32 %v693, 2147483648
        %v707 = vor.u32 1.1754944e-38, %v706
        %v708 = vsel %vm705, %v707, %v703
        %v709 = vmul.f32 1.0, %v708
        %v710 = vrcp.pop %v694
        %v711 = vmul.f32 %v694, %v710
        %v712 = vsub.f32 1.0, %v711
        %v713 = vmul.f32 %v710, %v712
        %v714 = vadd.f32 %v710, %v713
        %vm715 = vweird.f32 %v694
        %vm716 = vweird.f32 %v710
        %vm717 = vmor %vm715, %vm716
        %v718 = vsel %vm717, %v710, %v714
        %v719 = vand.u32 2147483647, %v694
        %vm720 = vcmp.eq.f32.partialorder %v719, 8.507059e+37
        %v721 = vand.u32 %v694, 2147483648
        %v722 = vor.u32 1.1754944e-38, %v721
        %v723 = vsel %vm720, %v722, %v718
        %v724 = vmul.f32 1.0, %v723
        %v725 = vperm.slane %v709, 0
        %v726 = vperm.slane %v724, 0
        %v727 = vld [vmem:[#allocation8] sm:$0xff]
        %v728 = vld [vmem:[#allocation8 + $0x8] sm:$0xff]
        %v729 = vld [vmem:[#allocation8 + $0x10] sm:$0xff]
        %v730 = vld [vmem:[#allocation8 + $0x18] sm:$0xff]
        %v731 = vld [vmem:[#allocation8 + $0x20] sm:$0xff]
        %v732 = vld [vmem:[#allocation8 + $0x28] sm:$0xff]
        %v733 = vld [vmem:[#allocation8 + $0x30] sm:$0xff]
        %v734 = vld [vmem:[#allocation8 + $0x38] sm:$0xff]
        %v735 = vld [vmem:[#allocation8 + $0x40] sm:$0xff]
        %v736 = vld [vmem:[#allocation8 + $0x48] sm:$0xff]
        %v737 = vld [vmem:[#allocation8 + $0x50] sm:$0xff]
        %v738 = vld [vmem:[#allocation8 + $0x58] sm:$0xff]
        %v739 = vld [vmem:[#allocation8 + $0x60] sm:$0xff]
        %v740 = vld [vmem:[#allocation8 + $0x68] sm:$0xff]
        %v741 = vld [vmem:[#allocation8 + $0x70] sm:$0xff]
        %v742 = vld [vmem:[#allocation8 + $0x78] sm:$0xff]
        %743 = vmatpush.xpose.msra.mxu0 0.0
        %744 = vmatpush.xpose.msra.mxu0 0.0
        %745 = vmatpush.xpose.msra.mxu0 0.0
        %746 = vmatpush.xpose.msra.mxu0 0.0
        %747 = vmatpush.xpose.msra.mxu0 0.0
        %748 = vmatpush.xpose.msra.mxu0 0.0
        %749 = vmatpush.xpose.msra.mxu0 0.0
        %750 = vmatpush.xpose.msra.mxu0 0.0
        %751 = vmatpush.xpose.msra.mxu0 0.0
        %752 = vmatpush.xpose.msra.mxu0 0.0
        %753 = vmatpush.xpose.msra.mxu0 0.0
        %754 = vmatpush.xpose.msra.mxu0 0.0
        %755 = vmatpush.xpose.msra.mxu0 0.0
        %756 = vmatpush.xpose.msra.mxu0 0.0
        %757 = vmatpush.xpose.msra.mxu0 0.0
        %758 = vmatpush.xpose.msra.mxu0 %v725
        %759 = vmatmul.f32.gmra.mxu0 %v727
        %v760 = vpop.f32.mrf.mxu0
        %v761 = vadd.f32 0.0, %v760
        %762 = vmatmul.f32.gmra.mxu0 %v729
        %v763 = vpop.f32.mrf.mxu0
        %v764 = vadd.f32 0.0, %v763
        %765 = vmatmul.f32.gmra.mxu0 %v731
        %v766 = vpop.f32.mrf.mxu0
        %v767 = vadd.f32 0.0, %v766
        %768 = vmatmul.f32.gmra.mxu0 %v733
        %v769 = vpop.f32.mrf.mxu0
        %v770 = vadd.f32 0.0, %v769
        %771 = vmatmul.f32.gmra.mxu0 %v735
        %v772 = vpop.f32.mrf.mxu0
        %v773 = vadd.f32 0.0, %v772
        %774 = vmatmul.f32.gmra.mxu0 %v737
        %v775 = vpop.f32.mrf.mxu0
        %v776 = vadd.f32 0.0, %v775
        %777 = vmatmul.f32.gmra.mxu0 %v739
        %v778 = vpop.f32.mrf.mxu0
        %v779 = vadd.f32 0.0, %v778
        %780 = vmatmul.f32.gmra.mxu0 %v741
        %v781 = vpop.f32.mrf.mxu0
        %v782 = vadd.f32 0.0, %v781
        %783 = vdwg.mxu0
        %784 = vmatpush.xpose.msra.mxu0 0.0
        %785 = vmatpush.xpose.msra.mxu0 0.0
        %786 = vmatpush.xpose.msra.mxu0 0.0
        %787 = vmatpush.xpose.msra.mxu0 0.0
        %788 = vmatpush.xpose.msra.mxu0 0.0
        %789 = vmatpush.xpose.msra.mxu0 0.0
        %790 = vmatpush.xpose.msra.mxu0 0.0
        %791 = vmatpush.xpose.msra.mxu0 0.0
        %792 = vmatpush.xpose.msra.mxu0 0.0
        %793 = vmatpush.xpose.msra.mxu0 0.0
        %794 = vmatpush.xpose.msra.mxu0 0.0
        %795 = vmatpush.xpose.msra.mxu0 0.0
        %796 = vmatpush.xpose.msra.mxu0 0.0
        %797 = vmatpush.xpose.msra.mxu0 0.0
        %798 = vmatpush.xpose.msra.mxu0 0.0
        %799 = vmatpush.xpose.msra.mxu0 %v726
        %800 = vmatmul.f32.gmra.mxu0 %v728
        %v801 = vpop.f32.mrf.mxu0
        %v802 = vadd.f32 %v761, %v801
        %803 = vmatmul.f32.gmra.mxu0 %v730
        %v804 = vpop.f32.mrf.mxu0
        %v805 = vadd.f32 %v764, %v804
        %806 = vmatmul.f32.gmra.mxu0 %v732
        %v807 = vpop.f32.mrf.mxu0
        %v808 = vadd.f32 %v767, %v807
        %809 = vmatmul.f32.gmra.mxu0 %v734
        %v810 = vpop.f32.mrf.mxu0
        %v811 = vadd.f32 %v770, %v810
        %812 = vmatmul.f32.gmra.mxu0 %v736
        %v813 = vpop.f32.mrf.mxu0
        %v814 = vadd.f32 %v773, %v813
        %815 = vmatmul.f32.gmra.mxu0 %v738
        %v816 = vpop.f32.mrf.mxu0
        %v817 = vadd.f32 %v776, %v816
        %818 = vmatmul.f32.gmra.mxu0 %v740
        %v819 = vpop.f32.mrf.mxu0
        %v820 = vadd.f32 %v779, %v819
        %821 = vmatmul.f32.gmra.mxu0 %v742
        %v822 = vpop.f32.mrf.mxu0
        %v823 = vadd.f32 %v782, %v822
        %824 = vdwg.mxu0
        %v825 = vld [vmem:[%s4] sm:$0xf]
        %vm826 = vcmask 523264
        %v828 = vsel %vm826, %v825, 0
        %830 = vmatpush.msra.mxu0 0.0
        %831 = vmatpush.msra.mxu0 0.0
        %832 = vmatpush.msra.mxu0 0.0
        %833 = vmatpush.msra.mxu0 0.0
        %834 = vmatpush.msra.mxu0 0.0
        %835 = vmatpush.msra.mxu0 0.0
        %836 = vmatpush.msra.mxu0 0.0
        %837 = vmatpush.msra.mxu0 0.0
        %838 = vmatpush.msra.mxu0 %v823
        %839 = vmatpush.msra.mxu0 %v820
        %840 = vmatpush.msra.mxu0 %v817
        %841 = vmatpush.msra.mxu0 %v814
        %842 = vmatpush.msra.mxu0 %v811
        %843 = vmatpush.msra.mxu0 %v808
        %844 = vmatpush.msra.mxu0 %v805
        %845 = vmatpush.msra.mxu0 %v802
        %846 = vmatmul.f32.gmra.mxu0 %v828
        %v847 = vpop.f32.mrf.mxu0
        %v848 = vadd.f32 0.0, %v847
        %849 = vdwg.mxu0
        %v850 = vmax.f32 %v848, 0.0
        %v851 = vld [vmem:[%s5] sm:$0xff]
        %v852 = vld [vmem:[%s5 + $0x8] sm:$0xff]
        %v853 = vld [vmem:[%s5 + $0x10] sm:$0xff]
        %v854 = vld [vmem:[%s5 + $0x18] sm:$0xff]
        %v855 = vld [vmem:[%s5 + $0x20] sm:$0xff]
        %v856 = vld [vmem:[%s5 + $0x28] sm:$0xff]
        %v857 = vld [vmem:[%s5 + $0x30] sm:$0xff]
        %v858 = vld [vmem:[%s5 + $0x38] sm:$0xff]
        %vm859 = vcmask 31744
        %v861 = vsel %vm859, %v851, 0
        %v864 = vsel %vm859, %v852, 0
        %v867 = vsel %vm859, %v853, 0
        %v870 = vsel %vm859, %v854, 0
        %v873 = vsel %vm859, %v855, 0
        %v876 = vsel %vm859, %v856, 0
        %v879 = vsel %vm859, %v857, 0
        %v882 = vsel %vm859, %v858, 0
        %vm884 = vcmask 1043456
        %v886 = vsel %vm884, %v850, 0
        %888 = vmatpush.msra.mxu0 0.0
        %889 = vmatpush.msra.mxu0 0.0
        %890 = vmatpush.msra.mxu0 0.0
        %891 = vmatpush.msra.mxu0 0.0
        %892 = vmatpush.msra.mxu0 0.0
        %893 = vmatpush.msra.mxu0 0.0
        %894 = vmatpush.msra.mxu0 0.0
        %895 = vmatpush.msra.mxu0 0.0
        %896 = vmatpush.msra.mxu0 0.0
        %897 = vmatpush.msra.mxu0 0.0
        %898 = vmatpush.msra.mxu0 0.0
        %899 = vmatpush.msra.mxu0 0.0
        %900 = vmatpush.msra.mxu0 0.0
        %901 = vmatpush.msra.mxu0 0.0
        %902 = vmatpush.msra.mxu0 0.0
        %903 = vmatpush.msra.mxu0 %v886
        %904 = vmatmul.f32.gmra.mxu0 %v861
        %v905 = vpop.f32.mrf.mxu0
        %v906 = vadd.f32 0.0, %v905
        %907 = vmatmul.f32.gmra.mxu0 %v864
        %v908 = vpop.f32.mrf.mxu0
        %v909 = vadd.f32 0.0, %v908
        %910 = vmatmul.f32.gmra.mxu0 %v867
        %v911 = vpop.f32.mrf.mxu0
        %v912 = vadd.f32 0.0, %v911
        %913 = vmatmul.f32.gmra.mxu0 %v870
        %v914 = vpop.f32.mrf.mxu0
        %v915 = vadd.f32 0.0, %v914
        %916 = vmatmul.f32.gmra.mxu0 %v873
        %v917 = vpop.f32.mrf.mxu0
        %v918 = vadd.f32 0.0, %v917
        %919 = vmatmul.f32.gmra.mxu0 %v876
        %v920 = vpop.f32.mrf.mxu0
        %v921 = vadd.f32 0.0, %v920
        %922 = vmatmul.f32.gmra.mxu0 %v879
        %v923 = vpop.f32.mrf.mxu0
        %v924 = vadd.f32 0.0, %v923
        %925 = vmatmul.f32.gmra.mxu0 %v882
        %v926 = vpop.f32.mrf.mxu0
        %v927 = vadd.f32 0.0, %v926
        %928 = vdwg.mxu0
        %v929 = vsub.f32 0.0, %v906
        %v930 = vsub.f32 0.0, %v909
        %v931 = vsub.f32 0.0, %v912
        %v932 = vsub.f32 0.0, %v915
        %v933 = vsub.f32 0.0, %v918
        %v934 = vsub.f32 0.0, %v921
        %v935 = vsub.f32 0.0, %v924
        %v936 = vsub.f32 0.0, %v927
        %v937 = vmul.f32 %v929, 1.442695
        %v938 = vpow.pop %v937
        %v939 = vmul.f32 %v930, 1.442695
        %v940 = vpow.pop %v939
        %v941 = vmul.f32 %v931, 1.442695
        %v942 = vpow.pop %v941
        %v943 = vmul.f32 %v932, 1.442695
        %v944 = vpow.pop %v943
        %v945 = vmul.f32 %v933, 1.442695
        %v946 = vpow.pop %v945
        %v947 = vmul.f32 %v934, 1.442695
        %v948 = vpow.pop %v947
        %v949 = vmul.f32 %v935, 1.442695
        %v950 = vpow.pop %v949
        %v951 = vmul.f32 %v936, 1.442695
        %v952 = vpow.pop %v951
        %v953 = vadd.f32 %v938, 1.0
        %v954 = vadd.f32 %v940, 1.0
        %v955 = vadd.f32 %v942, 1.0
        %v956 = vadd.f32 %v944, 1.0
        %v957 = vadd.f32 %v946, 1.0
        %v958 = vadd.f32 %v948, 1.0
        %v959 = vadd.f32 %v950, 1.0
        %v960 = vadd.f32 %v952, 1.0
        %v961 = vrcp.pop %v953
        %v962 = vmul.f32 %v953, %v961
        %v963 = vsub.f32 1.0, %v962
        %v964 = vmul.f32 %v961, %v963
        %v965 = vadd.f32 %v961, %v964
        %vm966 = vweird.f32 %v953
        %vm967 = vweird.f32 %v961
        %vm968 = vmor %vm966, %vm967
        %v969 = vsel %vm968, %v961, %v965
        %v970 = vand.u32 2147483647, %v953
        %vm971 = vcmp.eq.f32.partialorder %v970, 8.507059e+37
        %v972 = vand.u32 %v953, 2147483648
        %v973 = vor.u32 1.1754944e-38, %v972
        %v974 = vsel %vm971, %v973, %v969
        %v975 = vmul.f32 1.0, %v974
        %v976 = vrcp.pop %v954
        %v977 = vmul.f32 %v954, %v976
        %v978 = vsub.f32 1.0, %v977
        %v979 = vmul.f32 %v976, %v978
        %v980 = vadd.f32 %v976, %v979
        %vm981 = vweird.f32 %v954
        %vm982 = vweird.f32 %v976
        %vm983 = vmor %vm981, %vm982
        %v984 = vsel %vm983, %v976, %v980
        %v985 = vand.u32 2147483647, %v954
        %vm986 = vcmp.eq.f32.partialorder %v985, 8.507059e+37
        %v987 = vand.u32 %v954, 2147483648
        %v988 = vor.u32 1.1754944e-38, %v987
        %v989 = vsel %vm986, %v988, %v984
        %v990 = vmul.f32 1.0, %v989
        %v991 = vrcp.pop %v955
        %v992 = vmul.f32 %v955, %v991
        %v993 = vsub.f32 1.0, %v992
        %v994 = vmul.f32 %v991, %v993
        %v995 = vadd.f32 %v991, %v994
        %vm996 = vweird.f32 %v955
        %vm997 = vweird.f32 %v991
        %vm998 = vmor %vm996, %vm997
        %v999 = vsel %vm998, %v991, %v995
        %v1000 = vand.u32 2147483647, %v955
        %vm1001 = vcmp.eq.f32.partialorder %v1000, 8.507059e+37
        %v1002 = vand.u32 %v955, 2147483648
        %v1003 = vor.u32 1.1754944e-38, %v1002
        %v1004 = vsel %vm1001, %v1003, %v999
        %v1005 = vmul.f32 1.0, %v1004
        %v1006 = vrcp.pop %v956
        %v1007 = vmul.f32 %v956, %v1006
        %v1008 = vsub.f32 1.0, %v1007
        %v1009 = vmul.f32 %v1006, %v1008
        %v1010 = vadd.f32 %v1006, %v1009
        %vm1011 = vweird.f32 %v956
        %vm1012 = vweird.f32 %v1006
        %vm1013 = vmor %vm1011, %vm1012
        %v1014 = vsel %vm1013, %v1006, %v1010
        %v1015 = vand.u32 2147483647, %v956
        %vm1016 = vcmp.eq.f32.partialorder %v1015, 8.507059e+37
        %v1017 = vand.u32 %v956, 2147483648
        %v1018 = vor.u32 1.1754944e-38, %v1017
        %v1019 = vsel %vm1016, %v1018, %v1014
        %v1020 = vmul.f32 1.0, %v1019
        %v1021 = vrcp.pop %v957
        %v1022 = vmul.f32 %v957, %v1021
        %v1023 = vsub.f32 1.0, %v1022
        %v1024 = vmul.f32 %v1021, %v1023
        %v1025 = vadd.f32 %v1021, %v1024
        %vm1026 = vweird.f32 %v957
        %vm1027 = vweird.f32 %v1021
        %vm1028 = vmor %vm1026, %vm1027
        %v1029 = vsel %vm1028, %v1021, %v1025
        %v1030 = vand.u32 2147483647, %v957
        %vm1031 = vcmp.eq.f32.partialorder %v1030, 8.507059e+37
        %v1032 = vand.u32 %v957, 2147483648
        %v1033 = vor.u32 1.1754944e-38, %v1032
        %v1034 = vsel %vm1031, %v1033, %v1029
        %v1035 = vmul.f32 1.0, %v1034
        %v1036 = vrcp.pop %v958
        %v1037 = vmul.f32 %v958, %v1036
        %v1038 = vsub.f32 1.0, %v1037
        %v1039 = vmul.f32 %v1036, %v1038
        %v1040 = vadd.f32 %v1036, %v1039
        %vm1041 = vweird.f32 %v958
        %vm1042 = vweird.f32 %v1036
        %vm1043 = vmor %vm1041, %vm1042
        %v1044 = vsel %vm1043, %v1036, %v1040
        %v1045 = vand.u32 2147483647, %v958
        %vm1046 = vcmp.eq.f32.partialorder %v1045, 8.507059e+37
        %v1047 = vand.u32 %v958, 2147483648
        %v1048 = vor.u32 1.1754944e-38, %v1047
        %v1049 = vsel %vm1046, %v1048, %v1044
        %v1050 = vmul.f32 1.0, %v1049
        %v1051 = vrcp.pop %v959
        %v1052 = vmul.f32 %v959, %v1051
        %v1053 = vsub.f32 1.0, %v1052
        %v1054 = vmul.f32 %v1051, %v1053
        %v1055 = vadd.f32 %v1051, %v1054
        %vm1056 = vweird.f32 %v959
        %vm1057 = vweird.f32 %v1051
        %vm1058 = vmor %vm1056, %vm1057
        %v1059 = vsel %vm1058, %v1051, %v1055
        %v1060 = vand.u32 2147483647, %v959
        %vm1061 = vcmp.eq.f32.partialorder %v1060, 8.507059e+37
        %v1062 = vand.u32 %v959, 2147483648
        %v1063 = vor.u32 1.1754944e-38, %v1062
        %v1064 = vsel %vm1061, %v1063, %v1059
        %v1065 = vmul.f32 1.0, %v1064
        %v1066 = vrcp.pop %v960
        %v1067 = vmul.f32 %v960, %v1066
        %v1068 = vsub.f32 1.0, %v1067
        %v1069 = vmul.f32 %v1066, %v1068
        %v1070 = vadd.f32 %v1066, %v1069
        %vm1071 = vweird.f32 %v960
        %vm1072 = vweird.f32 %v1066
        %vm1073 = vmor %vm1071, %vm1072
        %v1074 = vsel %vm1073, %v1066, %v1070
        %v1075 = vand.u32 2147483647, %v960
        %vm1076 = vcmp.eq.f32.partialorder %v1075, 8.507059e+37
        %v1077 = vand.u32 %v960, 2147483648
        %v1078 = vor.u32 1.1754944e-38, %v1077
        %v1079 = vsel %vm1076, %v1078, %v1074
        %v1080 = vmul.f32 1.0, %v1079
        %1082 = vset.pattern.permute.xlu0 0
        %1083 = vperm.xlu0 %1082, %v975
        %v1084 = vpop.permute.xlu0 %1083
        %1087 = vset.pattern.permute.xlu0 0
        %1088 = vperm.xlu0 %1087, %v990
        %v1089 = vpop.permute.xlu0 %1088
        %1092 = vset.pattern.permute.xlu0 0
        %1093 = vperm.xlu0 %1092, %v1005
        %v1094 = vpop.permute.xlu0 %1093
        %1097 = vset.pattern.permute.xlu0 0
        %1098 = vperm.xlu0 %1097, %v1020
        %v1099 = vpop.permute.xlu0 %1098
        %1102 = vset.pattern.permute.xlu0 0
        %1103 = vperm.xlu0 %1102, %v1035
        %v1104 = vpop.permute.xlu0 %1103
        %1107 = vset.pattern.permute.xlu0 0
        %1108 = vperm.xlu0 %1107, %v1050
        %v1109 = vpop.permute.xlu0 %1108
        %1112 = vset.pattern.permute.xlu0 0
        %1113 = vperm.xlu0 %1112, %v1065
        %v1114 = vpop.permute.xlu0 %1113
        %1117 = vset.pattern.permute.xlu0 0
        %1118 = vperm.xlu0 %1117, %v1080
        %v1119 = vpop.permute.xlu0 %1118
        %v1121 = vmul.f32 %v322, %v1084
        %v1122 = vmul.f32 %v323, %v1084
        %v1123 = vmul.f32 %v324, %v1089
        %v1124 = vmul.f32 %v325, %v1089
        %v1125 = vmul.f32 %v326, %v1094
        %v1126 = vmul.f32 %v327, %v1094
        %v1127 = vmul.f32 %v328, %v1099
        %v1128 = vmul.f32 %v329, %v1099
        %v1129 = vmul.f32 %v330, %v1104
        %v1130 = vmul.f32 %v331, %v1104
        %v1131 = vmul.f32 %v332, %v1109
        %v1132 = vmul.f32 %v333, %v1109
        %v1133 = vmul.f32 %v334, %v1114
        %v1134 = vmul.f32 %v335, %v1114
        %v1135 = vmul.f32 %v336, %v1119
        %v1136 = vmul.f32 %v337, %v1119
        %1137 = vst [vmem:[%s321] sm:$0xff] %v1121
        %1138 = vst [vmem:[%s321 + $0x8] sm:$0xff] %v1122
        %1139 = vst [vmem:[%s321 + $0x10] sm:$0xff] %v1123
        %1140 = vst [vmem:[%s321 + $0x18] sm:$0xff] %v1124
        %1141 = vst [vmem:[%s321 + $0x20] sm:$0xff] %v1125
        %1142 = vst [vmem:[%s321 + $0x28] sm:$0xff] %v1126
        %1143 = vst [vmem:[%s321 + $0x30] sm:$0xff] %v1127
        %1144 = vst [vmem:[%s321 + $0x38] sm:$0xff] %v1128
        %1145 = vst [vmem:[%s321 + $0x40] sm:$0xff] %v1129
        %1146 = vst [vmem:[%s321 + $0x48] sm:$0xff] %v1130
        %1147 = vst [vmem:[%s321 + $0x50] sm:$0xff] %v1131
        %1148 = vst [vmem:[%s321 + $0x58] sm:$0xff] %v1132
        %1149 = vst [vmem:[%s321 + $0x60] sm:$0xff] %v1133
        %1150 = vst [vmem:[%s321 + $0x68] sm:$0xff] %v1134
        %1151 = vst [vmem:[%s321 + $0x70] sm:$0xff] %v1135
        %1152 = vst [vmem:[%s321 + $0x78] sm:$0xff] %v1136
        %s1153 = sand.u32 %s164, 1
        %s1154 = scalar_lea.sflag [#allocation4], %s1153
        %s1155 = sand.u32 %s164, 1
        %s1156 = smul.addr %s1155, 128
        %s1157 = scalar_lea.vmem [#allocation10], %s1156
        // Predicated region
        $region61: #{tpu_custom_call.1} parent=43 // pred_check
          %p1158 = pneg %p174
        $region62: #{tpu_custom_call.1} parent=43 // pred_check_branch
          %1160 = sbr.rel (%p1158) target = $region64
        $region63: #{tpu_custom_call.1} parent=43 // pred_region
          %1162 = vsyncadd %s1154, 0
          %s1163 = smul.addr %s25, 16
          %s1164 = smul.addr %s1163, 8
          %s1165 = scalar_lea.hbm %s6, %s1164
          %s1166 = sshll.u32 %s1157, 4
          %s1167 = int_to_ptr.vmem [resolvable:$true] %s1166
          %s1168 = sshll.u32 %s1165, 4
          %s1169 = int_to_ptr.hbm [resolvable:$true] %s1168
          %1174 = dma.vmem_to_hbm [thread:$0]  %s1167, 2048, %s1169, %s1154, 256, 256, 16
        $region64: #{tpu_custom_call.1} parent=43 // pred_fallthru
          _
      $region44: #{tpu_custom_call.1} parent=5 // pred_fallthru
        _
      %p1175 = scmp.le.s32.totalorder 2, %s20
      // Predicated region
      $region65: #{tpu_custom_call.1} parent=5 // pred_check
        %p1176 = pneg %p1175
      $region66: #{tpu_custom_call.1} parent=5 // pred_check_branch
        %1178 = sbr.rel (%p1176) target = $region68
      $region67: #{tpu_custom_call.1} parent=5 // pred_region
        %s1179 = ssub.s32 %s20, 2
        // Predicated region
        $region69: #{tpu_custom_call.1} parent=67 // pred_check
          %p1180 = pneg %p180
        $region70: #{tpu_custom_call.1} parent=67 // pred_check_branch
          %1182 = sbr.rel (%p1180) target = $region72
        $region71: #{tpu_custom_call.1} parent=67 // pred_region
          %s1183 = sand.u32 %s165, 1
          %s1184 = scalar_lea.sflag [#allocation4], %s1183
          %s1185 = sand.u32 %s165, 1
          %s1186 = smul.addr %s1185, 128
          %s1187 = scalar_lea.vmem [#allocation10], %s1186
          %1189 = dma.done %s1184, 2048
        $region72: #{tpu_custom_call.1} parent=67 // pred_fallthru
          _
      $region68: #{tpu_custom_call.1} parent=5 // pred_fallthru
        _
    $region6: #{tpu_custom_call.1} parent=1 // loop_footer
      %s24 = sadd.s32 1, %s20
    $region7: #{tpu_custom_call.1} parent=1 // loop_footer_branch
      %19 = sbr.rel target = $region3
    $region8: #{tpu_custom_call.1} parent=1 // loop_exit
      _
    %1190 = vsyncpa [#allocation3], 1
    %s1191 = scalar_lea.sflag [#allocation3], 1
    %1192 = vsyncpa %s1191, 1
    %1193 = vsyncpa [#allocation6], 1
    %1194 = vsyncpa [#allocation9], 1
    %1195 = vsyncpa [#allocation4], 1
    %s1196 = scalar_lea.sflag [#allocation4], 1
    %1197 = vsyncpa %s1196, 1

</llo_original>
